<compile_context>
chip_gen: v5e
topology: v5e:2x2
jax: 0.10.0
libtpu: 0.0.40
codegen_flags: <defaults>
</compile_context>

<pallas_src>
import numpy as np
import jax
import jax.numpy as jnp
from jax import lax
from jax.experimental import pallas as pl
from jax.experimental.pallas import tpu as pltpu

RES_LAYER = 0.5  # stand-in for args.res_layer (global in the reference code)


# --------------------------------------------------------------------------
# Prologue: per-node projections (runs once, O(N*H^2) — tiny next to N^2).
# --------------------------------------------------------------------------
def gat_prologue_kernel(x_ref, w1_ref, b1_ref, w2_ref, b2_ref, a1_ref, a2_ref,
                        s_row_ref, s_col_ref):
    x = x_ref[...]                                                     # [N, H]
    h1 = jnp.maximum(
        jnp.dot(x, w1_ref[...], preferred_element_type=jnp.float32) + b1_ref[...], 0.0)
    h2 = jnp.maximum(
        jnp.dot(x, w2_ref[...], preferred_element_type=jnp.float32) + b2_ref[...], 0.0)
    # attention Linear(2H, 1) split: att[i, j] = h1[i].a1 + h2[j].a2 + b_att
    s_row_ref[...] = lax.dot_general(h1, a1_ref[...], (((1,), (1,)), ((), ())),
                                     preferred_element_type=jnp.float32)   # [N, 1]
    s_col_ref[...] = lax.dot_general(a2_ref[...], h2, (((1,), (1,)), ((), ())),
                                     preferred_element_type=jnp.float32)   # [1, N]


# --------------------------------------------------------------------------
# Main kernel: one row tile (TM rows x all N columns) per grid step.
# --------------------------------------------------------------------------
def gat_row_kernel(scal_ref, s_row_ref, s_col_ref, adj_ref, xpad_ref,
                   support_ref, out_ref):
    b_att = scal_ref[0]
    res_over_1p = scal_ref[1]    # res / (1 + res)        (hoisted scalar)
    one_plus_res = scal_ref[2]   # 1 + res                (folded into recip)

    adj = adj_ref[...]                                   # [TM, N] edge values
    # mask == (adj != 0) by construction (no explicit zero-valued edges).
    edge = adj != 0.0

    att = s_row_ref[...] + s_col_ref[...] + b_att        # [TM,1]+[1,N] -> [TM,N]
    # Keep exp only at edges (select, not multiply: avoids inf*0 = NaN at
    # non-edge positions if att overflows there).
    exp_att = jnp.where(edge, jnp.exp(att), 0.0)

    # torch.sparse.sum(tmp_adj, dim=-1) + 1e-6, folded with the 1/(1+res)
    # factor into a single per-row EUP reciprocal (no N^2 divides).
    rowsum = jnp.sum(exp_att, axis=1, keepdims=True) + 1e-6           # [TM, 1]
    inv_norm = pl.reciprocal(rowsum * one_plus_res, approx=True)      # [TM, 1]

    # values = (exp_att / rowsum + res * adj) / (1 + res); zero off-edge
    # automatically since both exp_att and adj vanish there.
    values = exp_att * inv_norm + adj * res_over_1p                   # [TM, N]

    support_ref[...] = values
    # torch_sparse.spmm(ind, values, N, N, embeds)  (embeds lane-padded to Hp)
    out_ref[...] = jnp.dot(values, xpad_ref[...],
                           preferred_element_type=jnp.float32)        # [TM, Hp]


# --------------------------------------------------------------------------
# Wrapper
# --------------------------------------------------------------------------
def gat_layer(adj_dense, embeds, params, tm=None):
    """Returns (support_dense [N,N], aggregated_embeds [N,H])."""
    N, H = embeds.shape
    w1t, b1, w2t, b2, a1, a2, b_att = params

    # ---- prologue: per-node attention projections -------------------------
    s_row, s_col = pl.pallas_call(
        gat_prologue_kernel,
        out_shape=(jax.ShapeDtypeStruct((N, 1), jnp.float32),
                   jax.ShapeDtypeStruct((1, N), jnp.float32)),
        in_specs=[pl.BlockSpec(memory_space=pltpu.MemorySpace.VMEM)] * 7,
        out_specs=(pl.BlockSpec(memory_space=pltpu.MemorySpace.VMEM),
                   pl.BlockSpec(memory_space=pltpu.MemorySpace.VMEM)),
    )(embeds, w1t, b1, w2t, b2, a1, a2)

    # ---- pad feature dim to 128 lanes: full MXU width + lane-dense stores --
    Hp = ((H + 127) // 128) * 128
    x_pad = jnp.zeros((N, Hp), jnp.float32).at[:, :H].set(embeds)

    # ---- row-tile size (multiple of 8, divides N) --------------------------
    if tm is None:
        tm = next(t for t in (512, 256, 128, 64, 32, 16, 8) if N % t == 0)
    assert N % tm == 0 and tm % 8 == 0, "row tile must divide N and be a x8"

    res = float(RES_LAYER)
    scal = jnp.array([b_att, res / (1.0 + res), 1.0 + res], dtype=jnp.float32)

    # VMEM budget: double-buffered (TM,N) adj + support tiles, (TM,Hp) out,
    # resident padded embeds + s_col.  Cap well under v7x's 64 MiB.
    est = 4 * (2 * (2 * tm * N + tm * Hp + tm) + N * Hp + N)
    vmem_limit = int(min(max(2 * est, 32 * 1024 * 1024), 100 * 1024 * 1024))

    grid_spec = pltpu.PrefetchScalarGridSpec(
        num_scalar_prefetch=1,                       # scal -> SMEM
        grid=(N // tm,),
        in_specs=[
            pl.BlockSpec((tm, 1), lambda i, scal: (i, 0)),    # s_row tile
            pl.BlockSpec((1, N), lambda i, scal: (0, 0)),     # s_col resident
            pl.BlockSpec((tm, N), lambda i, scal: (i, 0)),    # adj row tile
            pl.BlockSpec((N, Hp), lambda i, scal: (0, 0)),    # padded embeds
        ],
        out_specs=(
            pl.BlockSpec((tm, N), lambda i, scal: (i, 0)),    # support tile
            pl.BlockSpec((tm, Hp), lambda i, scal: (i, 0)),   # out tile
        ),
    )

    support, out_pad = pl.pallas_call(
        gat_row_kernel,
        out_shape=(jax.ShapeDtypeStruct((N, N), jnp.float32),
                   jax.ShapeDtypeStruct((N, Hp), jnp.float32)),
        grid_spec=grid_spec,
        compiler_params=pltpu.CompilerParams(
            dimension_semantics=("parallel",),       # v7x: split rows on 2 TCs
            vmem_limit_bytes=vmem_limit),
    )(scal, s_row, s_col, adj_dense, x_pad)

    return support, out_pad[:, :H]


# --------------------------------------------------------------------------
# Pure-JAX edge-list reference (sparse semantics of the PyTorch module).
# --------------------------------------------------------------------------
def ref_forward(rows, cols, adj_vals_e, embeds, params, num_nodes):
    w1t, b1, w2t, b2, a1, a2, b_att = params
    h1 = jnp.maximum(embeds @ w1t + b1, 0.0)
    h2 = jnp.maximum(embeds @ w2t + b2, 0.0)
    f1 = h1[rows]
    f2 = h2[cols]
    att = (f1 * a1).sum(1) + (f2 * a2).sum(1) + b_att                  # [E]
    e = jnp.exp(att)
    rowsum = jax.ops.segment_sum(e, rows, num_segments=num_nodes) + 1e-6
    vals = (e / rowsum[rows] + RES_LAYER * adj_vals_e) / (1.0 + RES_LAYER)
    out = jax.ops.segment_sum(vals[:, None] * embeds[cols], rows,
                              num_segments=num_nodes)
    return vals, out


if __name__ == "__main__":
    N, H = 256, 32
    key = jax.random.PRNGKey(0)
    ks = jax.random.split(key, 9)

    # Deterministic parameter init (PyTorch Linear-style uniform bounds).
    lim = 1.0 / np.sqrt(H)
    W1 = jax.random.uniform(ks[0], (H, H), jnp.float32, -lim, lim)
    b1 = jax.random.uniform(ks[1], (1, H), jnp.float32, -lim, lim)
    W2 = jax.random.uniform(ks[2], (H, H), jnp.float32, -lim, lim)
    b2 = jax.random.uniform(ks[3], (1, H), jnp.float32, -lim, lim)
    lim_a = 1.0 / np.sqrt(2 * H)
    a_w = jax.random.uniform(ks[4], (1, 2 * H), jnp.float32, -lim_a, lim_a)
    a1, a2 = a_w[:, :H], a_w[:, H:]
    b_att = float(jax.random.uniform(ks[5], (), jnp.float32, -lim_a, lim_a))
    params = (W1.T, b1, W2.T, b2, a1, a2, b_att)  # kernel uses x @ W.T form

    # Deterministic inputs: embeds + a random sparse adjacency (~15% density,
    # strictly positive edge values so mask == (adj != 0)).
    embeds = jax.random.normal(ks[6], (N, H), jnp.float32)
    u = jax.random.uniform(ks[7], (N, N), jnp.float32)
    mask = (u < 0.15).astype(jnp.float32)
    vals_dense = jax.random.uniform(ks[8], (N, N), jnp.float32, 0.1, 1.0)
    adj_dense = mask * vals_dense

    # tm=64 -> grid=(4,): exercises the pipelined row loop.
    support, out = gat_layer(adj_dense, embeds, params, tm=64)
    jax.block_until_ready((support, out))

    # Validate against the sparse (edge-list) reference semantics.
    rows_np, cols_np = np.nonzero(np.array(mask))
    rows = jnp.asarray(rows_np, jnp.int32)
    cols = jnp.asarray(cols_np, jnp.int32)
    adj_vals_e = jnp.asarray(np.array(adj_dense)[rows_np, cols_np])
    ref_vals, ref_out = ref_forward(rows, cols, adj_vals_e, embeds, params, N)

    # Tolerances loosened slightly for the approx (EUP) per-row reciprocal.
    got_vals = np.array(support)[rows_np, cols_np]
    np.testing.assert_allclose(got_vals, np.array(ref_vals), rtol=5e-3, atol=5e-4)
    np.testing.assert_allclose(np.array(out), np.array(ref_out), rtol=5e-3, atol=5e-3)
    # support must be exactly zero off-edge.
    off = np.array(support) * (1.0 - np.array(mask))
    assert np.all(off == 0.0)

    print("KERNEL_OK")
</pallas_src>

<mosaic_0001>
module attributes {stable_mosaic.version = 11 : i64} {
  func.func @gat_prologue_kernel(%arg0: memref<256x32xf32, #tpu.memory_space<vmem>>, %arg1: memref<32x32xf32, #tpu.memory_space<vmem>>, %arg2: memref<1x32xf32, #tpu.memory_space<vmem>>, %arg3: memref<32x32xf32, #tpu.memory_space<vmem>>, %arg4: memref<1x32xf32, #tpu.memory_space<vmem>>, %arg5: memref<1x32xf32, #tpu.memory_space<vmem>>, %arg6: memref<1x32xf32, #tpu.memory_space<vmem>>, %arg7: memref<256x1xf32, #tpu.memory_space<vmem>>, %arg8: memref<1x256xf32, #tpu.memory_space<vmem>>) attributes {dimension_semantics = [], scalar_prefetch = 0 : i64, scratch_operands = 0 : i64, tpu.core_type = #tpu.core_type<tc>} {
    %c0 = arith.constant 0 : index
    %c0_0 = arith.constant 0 : index
    %0 = vector.load %arg0[%c0, %c0_0] : memref<256x32xf32, #tpu.memory_space<vmem>>, vector<256x32xf32>
    %c0_1 = arith.constant 0 : index
    %c0_2 = arith.constant 0 : index
    %1 = vector.load %arg1[%c0_1, %c0_2] : memref<32x32xf32, #tpu.memory_space<vmem>>, vector<32x32xf32>
    %cst = arith.constant dense<0.000000e+00> : vector<256x32xf32>
    %2 = tpu.matmul %0, %1, %cst {dimension_numbers = #tpu.dot_dimension_numbers<[1], [0], [0], [1], [0, 0, 1, 1], [], []>} : vector<256x32xf32>, vector<32x32xf32>, vector<256x32xf32> -> vector<256x32xf32>
    %c0_3 = arith.constant 0 : index
    %c0_4 = arith.constant 0 : index
    %3 = vector.load %arg2[%c0_3, %c0_4] : memref<1x32xf32, #tpu.memory_space<vmem>>, vector<1x32xf32>
    %4 = vector.broadcast %3 : vector<1x32xf32> to vector<256x32xf32>
    %5 = arith.addf %2, %4 : vector<256x32xf32>
    %cst_5 = arith.constant 0.000000e+00 : f32
    %6 = vector.broadcast %cst_5 : f32 to vector<256x32xf32>
    %7 = arith.maximumf %5, %6 : vector<256x32xf32>
    %c0_6 = arith.constant 0 : index
    %c0_7 = arith.constant 0 : index
    %8 = vector.load %arg3[%c0_6, %c0_7] : memref<32x32xf32, #tpu.memory_space<vmem>>, vector<32x32xf32>
    %cst_8 = arith.constant dense<0.000000e+00> : vector<256x32xf32>
    %9 = tpu.matmul %0, %8, %cst_8 {dimension_numbers = #tpu.dot_dimension_numbers<[1], [0], [0], [1], [0, 0, 1, 1], [], []>} : vector<256x32xf32>, vector<32x32xf32>, vector<256x32xf32> -> vector<256x32xf32>
    %c0_9 = arith.constant 0 : index
    %c0_10 = arith.constant 0 : index
    %10 = vector.load %arg4[%c0_9, %c0_10] : memref<1x32xf32, #tpu.memory_space<vmem>>, vector<1x32xf32>
    %11 = vector.broadcast %10 : vector<1x32xf32> to vector<256x32xf32>
    %12 = arith.addf %9, %11 : vector<256x32xf32>
    %cst_11 = arith.constant 0.000000e+00 : f32
    %13 = vector.broadcast %cst_11 : f32 to vector<256x32xf32>
    %14 = arith.maximumf %12, %13 : vector<256x32xf32>
    %c0_12 = arith.constant 0 : index
    %c0_13 = arith.constant 0 : index
    %15 = vector.load %arg5[%c0_12, %c0_13] : memref<1x32xf32, #tpu.memory_space<vmem>>, vector<1x32xf32>
    %cst_14 = arith.constant dense<0.000000e+00> : vector<256x1xf32>
    %16 = tpu.matmul %7, %15, %cst_14 {dimension_numbers = #tpu.dot_dimension_numbers<[1], [1], [0], [0], [0, 0, 1, 0], [], []>} : vector<256x32xf32>, vector<1x32xf32>, vector<256x1xf32> -> vector<256x1xf32>
    %c0_15 = arith.constant 0 : index
    %c0_16 = arith.constant 0 : index
    %17 = vector.load %arg7[%c0_15, %c0_16] : memref<256x1xf32, #tpu.memory_space<vmem>>, vector<256x1xf32>
    tpu.vector_store %arg7[%c0_15, %c0_16], %16 {strides = array<i32>} : memref<256x1xf32, #tpu.memory_space<vmem>>, vector<256x1xf32>,
    %c0_17 = arith.constant 0 : index
    %c0_18 = arith.constant 0 : index
    %18 = vector.load %arg6[%c0_17, %c0_18] : memref<1x32xf32, #tpu.memory_space<vmem>>, vector<1x32xf32>
    %cst_19 = arith.constant dense<0.000000e+00> : vector<1x256xf32>
    %19 = tpu.matmul %18, %14, %cst_19 {dimension_numbers = #tpu.dot_dimension_numbers<[1], [1], [0], [0], [0, 0, 1, 0], [], []>} : vector<1x32xf32>, vector<256x32xf32>, vector<1x256xf32> -> vector<1x256xf32>
    %c0_20 = arith.constant 0 : index
    %c0_21 = arith.constant 0 : index
    %20 = vector.load %arg8[%c0_20, %c0_21] : memref<1x256xf32, #tpu.memory_space<vmem>>, vector<1x256xf32>
    tpu.vector_store %arg8[%c0_20, %c0_21], %19 {strides = array<i32>} : memref<1x256xf32, #tpu.memory_space<vmem>>, vector<1x256xf32>,
    return
  }
}

</mosaic_0001>

<llo_original>
// kernel: tpu_custom_call.1
$region0: #{tpu_custom_call.1}
  #allocation0 [shape = 'u32[]', space=smem, size = 0x4, offset = 0x4, fixed_abs, tag = 'smem constant byte address 0x4 - core index']
  #allocation1 [shape = 'u32[72,128]{1,0:T(1,128)}', space=vmem, size = 0x9000, scoped, tag = 'internal scratch']
  %s0 = inlined_call_operand.vmem [shape: f32[256,32], index: 0, kind: input, shape index: {}]
  %s1 = inlined_call_operand.vmem [shape: f32[32,32], index: 1, kind: input, shape index: {}]
  %s2 = inlined_call_operand.vmem [shape: f32[1,32], index: 2, kind: input, shape index: {}]
  %s3 = inlined_call_operand.vmem [shape: f32[32,32], index: 3, kind: input, shape index: {}]
  %s4 = inlined_call_operand.vmem [shape: f32[1,32], index: 4, kind: input, shape index: {}]
  %s5 = inlined_call_operand.vmem [shape: f32[1,32], index: 5, kind: input, shape index: {}]
  %s6 = inlined_call_operand.vmem [shape: f32[1,32], index: 6, kind: input, shape index: {}]
  %s7 = inlined_call_operand.vmem [shape: f32[256,1], index: 7, kind: output, shape index: {0}]
  %s8 = inlined_call_operand.hbm [shape: f32[1,256], index: 8, kind: output, shape index: {1}]
  %9 = xla_tuple %s7, %s8
  %s10 = sld [smem:[#allocation0]]
  $region46: #{tpu_custom_call.1} parent=0
    _
  %s12 = ssub.s32 1, %s10
  %s13 = scalar_select 0, %s12, %s10
  $region1: #{tpu_custom_call.1} parent=0
    #allocation2 [shape = 'u8[1024]{0}', space=vmem, size = 0x400, scoped, tag = 'output window, operand 1, single buffered']
    #allocation3 [shape = 's32[1]{0}', space=sflag, size = 0x4, scoped, tag = 'scoped memory for tpu_custom_call.1']
    %14 = vsyncpa [#allocation3], 0
    // Predicated region
    $region2: #{tpu_custom_call.1} parent=1 // pred_check
      _
    $region3: #{tpu_custom_call.1} parent=1 // pred_check_branch
      %16 = sbr.rel (0) target = $region5
    $region4: #{tpu_custom_call.1} parent=1 // pred_region
      _
    $region5: #{tpu_custom_call.1} parent=1 // pred_fallthru
      _
    // Predicated region
    $region6: #{tpu_custom_call.1} parent=1 // pred_check
      _
    $region7: #{tpu_custom_call.1} parent=1 // pred_check_branch
      %18 = sbr.rel (0) target = $region9
    $region8: #{tpu_custom_call.1} parent=1 // pred_region
      _
    $region9: #{tpu_custom_call.1} parent=1 // pred_fallthru
      _
    // Predicated region
    $region10: #{tpu_custom_call.1} parent=1 // pred_check
      _
    $region11: #{tpu_custom_call.1} parent=1 // pred_check_branch
      %20 = sbr.rel (0) target = $region13
    $region12: #{tpu_custom_call.1} parent=1 // pred_region
      _
    $region13: #{tpu_custom_call.1} parent=1 // pred_fallthru
      _
    // Predicated region
    $region14: #{tpu_custom_call.1} parent=1 // pred_check
      _
    $region15: #{tpu_custom_call.1} parent=1 // pred_check_branch
      %22 = sbr.rel (0) target = $region17
    $region16: #{tpu_custom_call.1} parent=1 // pred_region
      _
    $region17: #{tpu_custom_call.1} parent=1 // pred_fallthru
      _
    // Predicated region
    $region18: #{tpu_custom_call.1} parent=1 // pred_check
      _
    $region19: #{tpu_custom_call.1} parent=1 // pred_check_branch
      %24 = sbr.rel (0) target = $region21
    $region20: #{tpu_custom_call.1} parent=1 // pred_region
      _
    $region21: #{tpu_custom_call.1} parent=1 // pred_fallthru
      _
    // Predicated region
    $region22: #{tpu_custom_call.1} parent=1 // pred_check
      _
    $region23: #{tpu_custom_call.1} parent=1 // pred_check_branch
      %26 = sbr.rel (0) target = $region25
    $region24: #{tpu_custom_call.1} parent=1 // pred_region
      _
    $region25: #{tpu_custom_call.1} parent=1 // pred_fallthru
      _
    // Predicated region
    $region26: #{tpu_custom_call.1} parent=1 // pred_check
      _
    $region27: #{tpu_custom_call.1} parent=1 // pred_check_branch
      %28 = sbr.rel (0) target = $region29
    $region28: #{tpu_custom_call.1} parent=1 // pred_region
      _
    $region29: #{tpu_custom_call.1} parent=1 // pred_fallthru
      _
    %v29 = vld [vmem:[%s0] sm:$0xff]
    %v30 = vld [vmem:[%s0 + $0x8] sm:$0xff]
    %v31 = vld [vmem:[%s0 + $0x10] sm:$0xff]
    %v32 = vld [vmem:[%s0 + $0x18] sm:$0xff]
    %v33 = vld [vmem:[%s0 + $0x20] sm:$0xff]
    %v34 = vld [vmem:[%s0 + $0x28] sm:$0xff]
    %v35 = vld [vmem:[%s0 + $0x30] sm:$0xff]
    %v36 = vld [vmem:[%s0 + $0x38] sm:$0xff]
    %v37 = vld [vmem:[%s0 + $0x40] sm:$0xff]
    %v38 = vld [vmem:[%s0 + $0x48] sm:$0xff]
    %v39 = vld [vmem:[%s0 + $0x50] sm:$0xff]
    %v40 = vld [vmem:[%s0 + $0x58] sm:$0xff]
    %v41 = vld [vmem:[%s0 + $0x60] sm:$0xff]
    %v42 = vld [vmem:[%s0 + $0x68] sm:$0xff]
    %v43 = vld [vmem:[%s0 + $0x70] sm:$0xff]
    %v44 = vld [vmem:[%s0 + $0x78] sm:$0xff]
    %v45 = vld [vmem:[%s0 + $0x80] sm:$0xff]
    %v46 = vld [vmem:[%s0 + $0x88] sm:$0xff]
    %v47 = vld [vmem:[%s0 + $0x90] sm:$0xff]
    %v48 = vld [vmem:[%s0 + $0x98] sm:$0xff]
    %v49 = vld [vmem:[%s0 + $0xa0] sm:$0xff]
    %v50 = vld [vmem:[%s0 + $0xa8] sm:$0xff]
    %v51 = vld [vmem:[%s0 + $0xb0] sm:$0xff]
    %v52 = vld [vmem:[%s0 + $0xb8] sm:$0xff]
    %v53 = vld [vmem:[%s0 + $0xc0] sm:$0xff]
    %v54 = vld [vmem:[%s0 + $0xc8] sm:$0xff]
    %v55 = vld [vmem:[%s0 + $0xd0] sm:$0xff]
    %v56 = vld [vmem:[%s0 + $0xd8] sm:$0xff]
    %v57 = vld [vmem:[%s0 + $0xe0] sm:$0xff]
    %v58 = vld [vmem:[%s0 + $0xe8] sm:$0xff]
    %v59 = vld [vmem:[%s0 + $0xf0] sm:$0xff]
    %v60 = vld [vmem:[%s0 + $0xf8] sm:$0xff]
    %v61 = vld [vmem:[%s1] sm:$0xff]
    %v62 = vld [vmem:[%s1 + $0x8] sm:$0xff]
    %v63 = vld [vmem:[%s1 + $0x10] sm:$0xff]
    %v64 = vld [vmem:[%s1 + $0x18] sm:$0xff]
    %v65 = vld [vmem:[%s2] sm:$0x1]
    %v67 = vperm.slane %v65, 0
    %vm69 = vcmask 261120
    %v71 = vsel %vm69, %v29, 0
    %v74 = vsel %vm69, %v30, 0
    %v77 = vsel %vm69, %v31, 0
    %v80 = vsel %vm69, %v32, 0
    %v83 = vsel %vm69, %v33, 0
    %v86 = vsel %vm69, %v34, 0
    %v89 = vsel %vm69, %v35, 0
    %v92 = vsel %vm69, %v36, 0
    %v95 = vsel %vm69, %v37, 0
    %v98 = vsel %vm69, %v38, 0
    %v101 = vsel %vm69, %v39, 0
    %v104 = vsel %vm69, %v40, 0
    %v107 = vsel %vm69, %v41, 0
    %v110 = vsel %vm69, %v42, 0
    %v113 = vsel %vm69, %v43, 0
    %v116 = vsel %vm69, %v44, 0
    %v119 = vsel %vm69, %v45, 0
    %v122 = vsel %vm69, %v46, 0
    %v125 = vsel %vm69, %v47, 0
    %v128 = vsel %vm69, %v48, 0
    %v131 = vsel %vm69, %v49, 0
    %v134 = vsel %vm69, %v50, 0
    %v137 = vsel %vm69, %v51, 0
    %v140 = vsel %vm69, %v52, 0
    %v143 = vsel %vm69, %v53, 0
    %v146 = vsel %vm69, %v54, 0
    %v149 = vsel %vm69, %v55, 0
    %v152 = vsel %vm69, %v56, 0
    %v155 = vsel %vm69, %v57, 0
    %v158 = vsel %vm69, %v58, 0
    %v161 = vsel %vm69, %v59, 0
    %v164 = vsel %vm69, %v60, 0
    %166 = vmatpush.msra.mxu0 0.0
    %167 = vmatpush.msra.mxu0 0.0
    %168 = vmatpush.msra.mxu0 0.0
    %169 = vmatpush.msra.mxu0 0.0
    %170 = vmatpush.msra.mxu0 0.0
    %171 = vmatpush.msra.mxu0 0.0
    %172 = vmatpush.msra.mxu0 0.0
    %173 = vmatpush.msra.mxu0 0.0
    %174 = vmatpush.msra.mxu0 0.0
    %175 = vmatpush.msra.mxu0 0.0
    %176 = vmatpush.msra.mxu0 0.0
    %177 = vmatpush.msra.mxu0 0.0
    %178 = vmatpush.msra.mxu0 %v64
    %179 = vmatpush.msra.mxu0 %v63
    %180 = vmatpush.msra.mxu0 %v62
    %181 = vmatpush.msra.mxu0 %v61
    %182 = vmatmul.f32.gmra.mxu0 %v71
    %v183 = vpop.f32.mrf.mxu0
    %v184 = vadd.f32 %v67, %v183
    %185 = vmatmul.f32.gmra.mxu0 %v74
    %v186 = vpop.f32.mrf.mxu0
    %v187 = vadd.f32 %v67, %v186
    %188 = vmatmul.f32.gmra.mxu0 %v77
    %v189 = vpop.f32.mrf.mxu0
    %v190 = vadd.f32 %v67, %v189
    %191 = vmatmul.f32.gmra.mxu0 %v80
    %v192 = vpop.f32.mrf.mxu0
    %v193 = vadd.f32 %v67, %v192
    %194 = vmatmul.f32.gmra.mxu0 %v83
    %v195 = vpop.f32.mrf.mxu0
    %v196 = vadd.f32 %v67, %v195
    %197 = vmatmul.f32.gmra.mxu0 %v86
    %v198 = vpop.f32.mrf.mxu0
    %v199 = vadd.f32 %v67, %v198
    %200 = vmatmul.f32.gmra.mxu0 %v89
    %v201 = vpop.f32.mrf.mxu0
    %v202 = vadd.f32 %v67, %v201
    %203 = vmatmul.f32.gmra.mxu0 %v92
    %v204 = vpop.f32.mrf.mxu0
    %v205 = vadd.f32 %v67, %v204
    %206 = vmatmul.f32.gmra.mxu0 %v95
    %v207 = vpop.f32.mrf.mxu0
    %v208 = vadd.f32 %v67, %v207
    %209 = vmatmul.f32.gmra.mxu0 %v98
    %v210 = vpop.f32.mrf.mxu0
    %v211 = vadd.f32 %v67, %v210
    %212 = vmatmul.f32.gmra.mxu0 %v101
    %v213 = vpop.f32.mrf.mxu0
    %v214 = vadd.f32 %v67, %v213
    %215 = vmatmul.f32.gmra.mxu0 %v104
    %v216 = vpop.f32.mrf.mxu0
    %v217 = vadd.f32 %v67, %v216
    %218 = vmatmul.f32.gmra.mxu0 %v107
    %v219 = vpop.f32.mrf.mxu0
    %v220 = vadd.f32 %v67, %v219
    %221 = vmatmul.f32.gmra.mxu0 %v110
    %v222 = vpop.f32.mrf.mxu0
    %v223 = vadd.f32 %v67, %v222
    %224 = vmatmul.f32.gmra.mxu0 %v113
    %v225 = vpop.f32.mrf.mxu0
    %v226 = vadd.f32 %v67, %v225
    %227 = vmatmul.f32.gmra.mxu0 %v116
    %v228 = vpop.f32.mrf.mxu0
    %v229 = vadd.f32 %v67, %v228
    %230 = vmatmul.f32.gmra.mxu0 %v119
    %v231 = vpop.f32.mrf.mxu0
    %v232 = vadd.f32 %v67, %v231
    %233 = vmatmul.f32.gmra.mxu0 %v122
    %v234 = vpop.f32.mrf.mxu0
    %v235 = vadd.f32 %v67, %v234
    %236 = vmatmul.f32.gmra.mxu0 %v125
    %v237 = vpop.f32.mrf.mxu0
    %v238 = vadd.f32 %v67, %v237
    %239 = vmatmul.f32.gmra.mxu0 %v128
    %v240 = vpop.f32.mrf.mxu0
    %v241 = vadd.f32 %v67, %v240
    %242 = vmatmul.f32.gmra.mxu0 %v131
    %v243 = vpop.f32.mrf.mxu0
    %v244 = vadd.f32 %v67, %v243
    %245 = vmatmul.f32.gmra.mxu0 %v134
    %v246 = vpop.f32.mrf.mxu0
    %v247 = vadd.f32 %v67, %v246
    %248 = vmatmul.f32.gmra.mxu0 %v137
    %v249 = vpop.f32.mrf.mxu0
    %v250 = vadd.f32 %v67, %v249
    %251 = vmatmul.f32.gmra.mxu0 %v140
    %v252 = vpop.f32.mrf.mxu0
    %v253 = vadd.f32 %v67, %v252
    %254 = vmatmul.f32.gmra.mxu0 %v143
    %v255 = vpop.f32.mrf.mxu0
    %v256 = vadd.f32 %v67, %v255
    %257 = vmatmul.f32.gmra.mxu0 %v146
    %v258 = vpop.f32.mrf.mxu0
    %v259 = vadd.f32 %v67, %v258
    %260 = vmatmul.f32.gmra.mxu0 %v149
    %v261 = vpop.f32.mrf.mxu0
    %v262 = vadd.f32 %v67, %v261
    %263 = vmatmul.f32.gmra.mxu0 %v152
    %v264 = vpop.f32.mrf.mxu0
    %v265 = vadd.f32 %v67, %v264
    %266 = vmatmul.f32.gmra.mxu0 %v155
    %v267 = vpop.f32.mrf.mxu0
    %v268 = vadd.f32 %v67, %v267
    %269 = vmatmul.f32.gmra.mxu0 %v158
    %v270 = vpop.f32.mrf.mxu0
    %v271 = vadd.f32 %v67, %v270
    %272 = vmatmul.f32.gmra.mxu0 %v161
    %v273 = vpop.f32.mrf.mxu0
    %v274 = vadd.f32 %v67, %v273
    %275 = vmatmul.f32.gmra.mxu0 %v164
    %v276 = vpop.f32.mrf.mxu0
    %v277 = vadd.f32 %v67, %v276
    %278 = vdwg.mxu0
    %v279 = vmax.f32 %v184, 0.0
    %v280 = vmax.f32 %v187, 0.0
    %v281 = vmax.f32 %v190, 0.0
    %v282 = vmax.f32 %v193, 0.0
    %v283 = vmax.f32 %v196, 0.0
    %v284 = vmax.f32 %v199, 0.0
    %v285 = vmax.f32 %v202, 0.0
    %v286 = vmax.f32 %v205, 0.0
    %v287 = vmax.f32 %v208, 0.0
    %v288 = vmax.f32 %v211, 0.0
    %v289 = vmax.f32 %v214, 0.0
    %v290 = vmax.f32 %v217, 0.0
    %v291 = vmax.f32 %v220, 0.0
    %v292 = vmax.f32 %v223, 0.0
    %v293 = vmax.f32 %v226, 0.0
    %v294 = vmax.f32 %v229, 0.0
    %v295 = vmax.f32 %v232, 0.0
    %v296 = vmax.f32 %v235, 0.0
    %v297 = vmax.f32 %v238, 0.0
    %v298 = vmax.f32 %v241, 0.0
    %v299 = vmax.f32 %v244, 0.0
    %v300 = vmax.f32 %v247, 0.0
    %v301 = vmax.f32 %v250, 0.0
    %v302 = vmax.f32 %v253, 0.0
    %v303 = vmax.f32 %v256, 0.0
    %v304 = vmax.f32 %v259, 0.0
    %v305 = vmax.f32 %v262, 0.0
    %v306 = vmax.f32 %v265, 0.0
    %v307 = vmax.f32 %v268, 0.0
    %v308 = vmax.f32 %v271, 0.0
    %v309 = vmax.f32 %v274, 0.0
    %v310 = vmax.f32 %v277, 0.0
    %v311 = vld [vmem:[%s3] sm:$0xff]
    %v312 = vld [vmem:[%s3 + $0x8] sm:$0xff]
    %v313 = vld [vmem:[%s3 + $0x10] sm:$0xff]
    %v314 = vld [vmem:[%s3 + $0x18] sm:$0xff]
    %v315 = vld [vmem:[%s4] sm:$0x1]
    %v317 = vperm.slane %v315, 0
    %319 = vmatpush.msra.mxu0 0.0
    %320 = vmatpush.msra.mxu0 0.0
    %321 = vmatpush.msra.mxu0 0.0
    %322 = vmatpush.msra.mxu0 0.0
    %323 = vmatpush.msra.mxu0 0.0
    %324 = vmatpush.msra.mxu0 0.0
    %325 = vmatpush.msra.mxu0 0.0
    %326 = vmatpush.msra.mxu0 0.0
    %327 = vmatpush.msra.mxu0 0.0
    %328 = vmatpush.msra.mxu0 0.0
    %329 = vmatpush.msra.mxu0 0.0
    %330 = vmatpush.msra.mxu0 0.0
    %331 = vmatpush.msra.mxu0 %v314
    %332 = vmatpush.msra.mxu0 %v313
    %333 = vmatpush.msra.mxu0 %v312
    %334 = vmatpush.msra.mxu0 %v311
    %335 = vmatmul.f32.gmra.mxu0 %v71
    %v336 = vpop.f32.mrf.mxu0
    %v337 = vadd.f32 %v317, %v336
    %338 = vmatmul.f32.gmra.mxu0 %v74
    %v339 = vpop.f32.mrf.mxu0
    %v340 = vadd.f32 %v317, %v339
    %341 = vmatmul.f32.gmra.mxu0 %v77
    %v342 = vpop.f32.mrf.mxu0
    %v343 = vadd.f32 %v317, %v342
    %344 = vmatmul.f32.gmra.mxu0 %v80
    %v345 = vpop.f32.mrf.mxu0
    %v346 = vadd.f32 %v317, %v345
    %347 = vmatmul.f32.gmra.mxu0 %v83
    %v348 = vpop.f32.mrf.mxu0
    %v349 = vadd.f32 %v317, %v348
    %350 = vmatmul.f32.gmra.mxu0 %v86
    %v351 = vpop.f32.mrf.mxu0
    %v352 = vadd.f32 %v317, %v351
    %353 = vmatmul.f32.gmra.mxu0 %v89
    %v354 = vpop.f32.mrf.mxu0
    %v355 = vadd.f32 %v317, %v354
    %356 = vmatmul.f32.gmra.mxu0 %v92
    %v357 = vpop.f32.mrf.mxu0
    %v358 = vadd.f32 %v317, %v357
    %359 = vmatmul.f32.gmra.mxu0 %v95
    %v360 = vpop.f32.mrf.mxu0
    %v361 = vadd.f32 %v317, %v360
    %362 = vmatmul.f32.gmra.mxu0 %v98
    %v363 = vpop.f32.mrf.mxu0
    %v364 = vadd.f32 %v317, %v363
    %365 = vmatmul.f32.gmra.mxu0 %v101
    %v366 = vpop.f32.mrf.mxu0
    %v367 = vadd.f32 %v317, %v366
    %368 = vmatmul.f32.gmra.mxu0 %v104
    %v369 = vpop.f32.mrf.mxu0
    %v370 = vadd.f32 %v317, %v369
    %371 = vmatmul.f32.gmra.mxu0 %v107
    %v372 = vpop.f32.mrf.mxu0
    %v373 = vadd.f32 %v317, %v372
    %374 = vmatmul.f32.gmra.mxu0 %v110
    %v375 = vpop.f32.mrf.mxu0
    %v376 = vadd.f32 %v317, %v375
    %377 = vmatmul.f32.gmra.mxu0 %v113
    %v378 = vpop.f32.mrf.mxu0
    %v379 = vadd.f32 %v317, %v378
    %380 = vmatmul.f32.gmra.mxu0 %v116
    %v381 = vpop.f32.mrf.mxu0
    %v382 = vadd.f32 %v317, %v381
    %383 = vmatmul.f32.gmra.mxu0 %v119
    %v384 = vpop.f32.mrf.mxu0
    %v385 = vadd.f32 %v317, %v384
    %386 = vmatmul.f32.gmra.mxu0 %v122
    %v387 = vpop.f32.mrf.mxu0
    %v388 = vadd.f32 %v317, %v387
    %389 = vmatmul.f32.gmra.mxu0 %v125
    %v390 = vpop.f32.mrf.mxu0
    %v391 = vadd.f32 %v317, %v390
    %392 = vmatmul.f32.gmra.mxu0 %v128
    %v393 = vpop.f32.mrf.mxu0
    %v394 = vadd.f32 %v317, %v393
    %395 = vmatmul.f32.gmra.mxu0 %v131
    %v396 = vpop.f32.mrf.mxu0
    %v397 = vadd.f32 %v317, %v396
    %398 = vmatmul.f32.gmra.mxu0 %v134
    %v399 = vpop.f32.mrf.mxu0
    %v400 = vadd.f32 %v317, %v399
    %401 = vmatmul.f32.gmra.mxu0 %v137
    %v402 = vpop.f32.mrf.mxu0
    %v403 = vadd.f32 %v317, %v402
    %404 = vmatmul.f32.gmra.mxu0 %v140
    %v405 = vpop.f32.mrf.mxu0
    %v406 = vadd.f32 %v317, %v405
    %407 = vmatmul.f32.gmra.mxu0 %v143
    %v408 = vpop.f32.mrf.mxu0
    %v409 = vadd.f32 %v317, %v408
    %410 = vmatmul.f32.gmra.mxu0 %v146
    %v411 = vpop.f32.mrf.mxu0
    %v412 = vadd.f32 %v317, %v411
    %413 = vmatmul.f32.gmra.mxu0 %v149
    %v414 = vpop.f32.mrf.mxu0
    %v415 = vadd.f32 %v317, %v414
    %416 = vmatmul.f32.gmra.mxu0 %v152
    %v417 = vpop.f32.mrf.mxu0
    %v418 = vadd.f32 %v317, %v417
    %419 = vmatmul.f32.gmra.mxu0 %v155
    %v420 = vpop.f32.mrf.mxu0
    %v421 = vadd.f32 %v317, %v420
    %422 = vmatmul.f32.gmra.mxu0 %v158
    %v423 = vpop.f32.mrf.mxu0
    %v424 = vadd.f32 %v317, %v423
    %425 = vmatmul.f32.gmra.mxu0 %v161
    %v426 = vpop.f32.mrf.mxu0
    %v427 = vadd.f32 %v317, %v426
    %428 = vmatmul.f32.gmra.mxu0 %v164
    %v429 = vpop.f32.mrf.mxu0
    %v430 = vadd.f32 %v317, %v429
    %431 = vdwg.mxu0
    %v432 = vmax.f32 %v337, 0.0
    %v433 = vmax.f32 %v340, 0.0
    %v434 = vmax.f32 %v343, 0.0
    %v435 = vmax.f32 %v346, 0.0
    %v436 = vmax.f32 %v349, 0.0
    %v437 = vmax.f32 %v352, 0.0
    %v438 = vmax.f32 %v355, 0.0
    %v439 = vmax.f32 %v358, 0.0
    %v440 = vmax.f32 %v361, 0.0
    %v441 = vmax.f32 %v364, 0.0
    %v442 = vmax.f32 %v367, 0.0
    %v443 = vmax.f32 %v370, 0.0
    %v444 = vmax.f32 %v373, 0.0
    %v445 = vmax.f32 %v376, 0.0
    %v446 = vmax.f32 %v379, 0.0
    %v447 = vmax.f32 %v382, 0.0
    %v448 = vmax.f32 %v385, 0.0
    %v449 = vmax.f32 %v388, 0.0
    %v450 = vmax.f32 %v391, 0.0
    %v451 = vmax.f32 %v394, 0.0
    %v452 = vmax.f32 %v397, 0.0
    %v453 = vmax.f32 %v400, 0.0
    %v454 = vmax.f32 %v403, 0.0
    %v455 = vmax.f32 %v406, 0.0
    %v456 = vmax.f32 %v409, 0.0
    %v457 = vmax.f32 %v412, 0.0
    %v458 = vmax.f32 %v415, 0.0
    %v459 = vmax.f32 %v418, 0.0
    %v460 = vmax.f32 %v421, 0.0
    %v461 = vmax.f32 %v424, 0.0
    %v462 = vmax.f32 %v427, 0.0
    %v463 = vmax.f32 %v430, 0.0
    %v464 = vld [vmem:[%s5] sm:$0x1]
    %v466 = vperm.slane %v464, 0
    %v468 = vmul.f32 %v279, %v466
    %v469 = vmul.f32 %v280, %v466
    %v470 = vmul.f32 %v281, %v466
    %v471 = vmul.f32 %v282, %v466
    %v472 = vmul.f32 %v283, %v466
    %v473 = vmul.f32 %v284, %v466
    %v474 = vmul.f32 %v285, %v466
    %v475 = vmul.f32 %v286, %v466
    %v476 = vmul.f32 %v287, %v466
    %v477 = vmul.f32 %v288, %v466
    %v478 = vmul.f32 %v289, %v466
    %v479 = vmul.f32 %v290, %v466
    %v480 = vmul.f32 %v291, %v466
    %v481 = vmul.f32 %v292, %v466
    %v482 = vmul.f32 %v293, %v466
    %v483 = vmul.f32 %v294, %v466
    %v484 = vmul.f32 %v295, %v466
    %v485 = vmul.f32 %v296, %v466
    %v486 = vmul.f32 %v297, %v466
    %v487 = vmul.f32 %v298, %v466
    %v488 = vmul.f32 %v299, %v466
    %v489 = vmul.f32 %v300, %v466
    %v490 = vmul.f32 %v301, %v466
    %v491 = vmul.f32 %v302, %v466
    %v492 = vmul.f32 %v303, %v466
    %v493 = vmul.f32 %v304, %v466
    %v494 = vmul.f32 %v305, %v466
    %v495 = vmul.f32 %v306, %v466
    %v496 = vmul.f32 %v307, %v466
    %v497 = vmul.f32 %v308, %v466
    %v498 = vmul.f32 %v309, %v466
    %v499 = vmul.f32 %v310, %v466
    %v500 = vsel %vm69, %v468, 0.0
    %501 = vadd.xlane.f32.xlu0 %v500
    %v502 = vpop.xlane.xlu0 %501
    %v503 = vsel %vm69, %v469, 0.0
    %504 = vadd.xlane.f32.xlu0 %v503
    %v505 = vpop.xlane.xlu0 %504
    %v506 = vsel %vm69, %v470, 0.0
    %507 = vadd.xlane.f32.xlu0 %v506
    %v508 = vpop.xlane.xlu0 %507
    %v509 = vsel %vm69, %v471, 0.0
    %510 = vadd.xlane.f32.xlu0 %v509
    %v511 = vpop.xlane.xlu0 %510
    %v512 = vsel %vm69, %v472, 0.0
    %513 = vadd.xlane.f32.xlu0 %v512
    %v514 = vpop.xlane.xlu0 %513
    %v515 = vsel %vm69, %v473, 0.0
    %516 = vadd.xlane.f32.xlu0 %v515
    %v517 = vpop.xlane.xlu0 %516
    %v518 = vsel %vm69, %v474, 0.0
    %519 = vadd.xlane.f32.xlu0 %v518
    %v520 = vpop.xlane.xlu0 %519
    %v521 = vsel %vm69, %v475, 0.0
    %522 = vadd.xlane.f32.xlu0 %v521
    %v523 = vpop.xlane.xlu0 %522
    %v524 = vsel %vm69, %v476, 0.0
    %525 = vadd.xlane.f32.xlu0 %v524
    %v526 = vpop.xlane.xlu0 %525
    %v527 = vsel %vm69, %v477, 0.0
    %528 = vadd.xlane.f32.xlu0 %v527
    %v529 = vpop.xlane.xlu0 %528
    %v530 = vsel %vm69, %v478, 0.0
    %531 = vadd.xlane.f32.xlu0 %v530
    %v532 = vpop.xlane.xlu0 %531
    %v533 = vsel %vm69, %v479, 0.0
    %534 = vadd.xlane.f32.xlu0 %v533
    %v535 = vpop.xlane.xlu0 %534
    %v536 = vsel %vm69, %v480, 0.0
    %537 = vadd.xlane.f32.xlu0 %v536
    %v538 = vpop.xlane.xlu0 %537
    %v539 = vsel %vm69, %v481, 0.0
    %540 = vadd.xlane.f32.xlu0 %v539
    %v541 = vpop.xlane.xlu0 %540
    %v542 = vsel %vm69, %v482, 0.0
    %543 = vadd.xlane.f32.xlu0 %v542
    %v544 = vpop.xlane.xlu0 %543
    %v545 = vsel %vm69, %v483, 0.0
    %546 = vadd.xlane.f32.xlu0 %v545
    %v547 = vpop.xlane.xlu0 %546
    %v548 = vsel %vm69, %v484, 0.0
    %549 = vadd.xlane.f32.xlu0 %v548
    %v550 = vpop.xlane.xlu0 %549
    %v551 = vsel %vm69, %v485, 0.0
    %552 = vadd.xlane.f32.xlu0 %v551
    %v553 = vpop.xlane.xlu0 %552
    %v554 = vsel %vm69, %v486, 0.0
    %555 = vadd.xlane.f32.xlu0 %v554
    %v556 = vpop.xlane.xlu0 %555
    %v557 = vsel %vm69, %v487, 0.0
    %558 = vadd.xlane.f32.xlu0 %v557
    %v559 = vpop.xlane.xlu0 %558
    %v560 = vsel %vm69, %v488, 0.0
    %561 = vadd.xlane.f32.xlu0 %v560
    %v562 = vpop.xlane.xlu0 %561
    %v563 = vsel %vm69, %v489, 0.0
    %564 = vadd.xlane.f32.xlu0 %v563
    %v565 = vpop.xlane.xlu0 %564
    %v566 = vsel %vm69, %v490, 0.0
    %567 = vadd.xlane.f32.xlu0 %v566
    %v568 = vpop.xlane.xlu0 %567
    %v569 = vsel %vm69, %v491, 0.0
    %570 = vadd.xlane.f32.xlu0 %v569
    %v571 = vpop.xlane.xlu0 %570
    %v572 = vsel %vm69, %v492, 0.0
    %573 = vadd.xlane.f32.xlu0 %v572
    %v574 = vpop.xlane.xlu0 %573
    %v575 = vsel %vm69, %v493, 0.0
    %576 = vadd.xlane.f32.xlu0 %v575
    %v577 = vpop.xlane.xlu0 %576
    %v578 = vsel %vm69, %v494, 0.0
    %579 = vadd.xlane.f32.xlu0 %v578
    %v580 = vpop.xlane.xlu0 %579
    %v581 = vsel %vm69, %v495, 0.0
    %582 = vadd.xlane.f32.xlu0 %v581
    %v583 = vpop.xlane.xlu0 %582
    %v584 = vsel %vm69, %v496, 0.0
    %585 = vadd.xlane.f32.xlu0 %v584
    %v586 = vpop.xlane.xlu0 %585
    %v587 = vsel %vm69, %v497, 0.0
    %588 = vadd.xlane.f32.xlu0 %v587
    %v589 = vpop.xlane.xlu0 %588
    %v590 = vsel %vm69, %v498, 0.0
    %591 = vadd.xlane.f32.xlu0 %v590
    %v592 = vpop.xlane.xlu0 %591
    %v593 = vsel %vm69, %v499, 0.0
    %594 = vadd.xlane.f32.xlu0 %v593
    %v595 = vpop.xlane.xlu0 %594
    %vm596 = vcmask 7168
    %597 = vst.msk [vmem:[%s7] sm:$0xff] %vm596, %v502
    %598 = vst.msk [vmem:[%s7 + $0x8] sm:$0xff] %vm596, %v505
    %599 = vst.msk [vmem:[%s7 + $0x10] sm:$0xff] %vm596, %v508
    %600 = vst.msk [vmem:[%s7 + $0x18] sm:$0xff] %vm596, %v511
    %601 = vst.msk [vmem:[%s7 + $0x20] sm:$0xff] %vm596, %v514
    %602 = vst.msk [vmem:[%s7 + $0x28] sm:$0xff] %vm596, %v517
    %603 = vst.msk [vmem:[%s7 + $0x30] sm:$0xff] %vm596, %v520
    %604 = vst.msk [vmem:[%s7 + $0x38] sm:$0xff] %vm596, %v523
    %605 = vst.msk [vmem:[%s7 + $0x40] sm:$0xff] %vm596, %v526
    %606 = vst.msk [vmem:[%s7 + $0x48] sm:$0xff] %vm596, %v529
    %607 = vst.msk [vmem:[%s7 + $0x50] sm:$0xff] %vm596, %v532
    %608 = vst.msk [vmem:[%s7 + $0x58] sm:$0xff] %vm596, %v535
    %609 = vst.msk [vmem:[%s7 + $0x60] sm:$0xff] %vm596, %v538
    %610 = vst.msk [vmem:[%s7 + $0x68] sm:$0xff] %vm596, %v541
    %611 = vst.msk [vmem:[%s7 + $0x70] sm:$0xff] %vm596, %v544
    %612 = vst.msk [vmem:[%s7 + $0x78] sm:$0xff] %vm596, %v547
    %613 = vst.msk [vmem:[%s7 + $0x80] sm:$0xff] %vm596, %v550
    %614 = vst.msk [vmem:[%s7 + $0x88] sm:$0xff] %vm596, %v553
    %615 = vst.msk [vmem:[%s7 + $0x90] sm:$0xff] %vm596, %v556
    %616 = vst.msk [vmem:[%s7 + $0x98] sm:$0xff] %vm596, %v559
    %617 = vst.msk [vmem:[%s7 + $0xa0] sm:$0xff] %vm596, %v562
    %618 = vst.msk [vmem:[%s7 + $0xa8] sm:$0xff] %vm596, %v565
    %619 = vst.msk [vmem:[%s7 + $0xb0] sm:$0xff] %vm596, %v568
    %620 = vst.msk [vmem:[%s7 + $0xb8] sm:$0xff] %vm596, %v571
    %621 = vst.msk [vmem:[%s7 + $0xc0] sm:$0xff] %vm596, %v574
    %622 = vst.msk [vmem:[%s7 + $0xc8] sm:$0xff] %vm596, %v577
    %623 = vst.msk [vmem:[%s7 + $0xd0] sm:$0xff] %vm596, %v580
    %624 = vst.msk [vmem:[%s7 + $0xd8] sm:$0xff] %vm596, %v583
    %625 = vst.msk [vmem:[%s7 + $0xe0] sm:$0xff] %vm596, %v586
    %626 = vst.msk [vmem:[%s7 + $0xe8] sm:$0xff] %vm596, %v589
    %627 = vst.msk [vmem:[%s7 + $0xf0] sm:$0xff] %vm596, %v592
    %628 = vst.msk [vmem:[%s7 + $0xf8] sm:$0xff] %vm596, %v595
    %v629 = vld [vmem:[%s6] sm:$0x1]
    %v631 = vsel %vm69, %v629, 0
    %v634 = vsel %vm69, %v432, 0
    %v637 = vsel %vm69, %v433, 0
    %v640 = vsel %vm69, %v434, 0
    %v643 = vsel %vm69, %v435, 0
    %v646 = vsel %vm69, %v436, 0
    %v649 = vsel %vm69, %v437, 0
    %v652 = vsel %vm69, %v438, 0
    %v655 = vsel %vm69, %v439, 0
    %v658 = vsel %vm69, %v440, 0
    %v661 = vsel %vm69, %v441, 0
    %v664 = vsel %vm69, %v442, 0
    %v667 = vsel %vm69, %v443, 0
    %v670 = vsel %vm69, %v444, 0
    %v673 = vsel %vm69, %v445, 0
    %v676 = vsel %vm69, %v446, 0
    %v679 = vsel %vm69, %v447, 0
    %v682 = vsel %vm69, %v448, 0
    %v685 = vsel %vm69, %v449, 0
    %v688 = vsel %vm69, %v450, 0
    %v691 = vsel %vm69, %v451, 0
    %v694 = vsel %vm69, %v452, 0
    %v697 = vsel %vm69, %v453, 0
    %v700 = vsel %vm69, %v454, 0
    %v703 = vsel %vm69, %v455, 0
    %v706 = vsel %vm69, %v456, 0
    %v709 = vsel %vm69, %v457, 0
    %v712 = vsel %vm69, %v458, 0
    %v715 = vsel %vm69, %v459, 0
    %v718 = vsel %vm69, %v460, 0
    %v721 = vsel %vm69, %v461, 0
    %v724 = vsel %vm69, %v462, 0
    %v727 = vsel %vm69, %v463, 0
    %729 = vmatpush.xpose.msra.mxu0 %v679
    %730 = vmatpush.xpose.msra.mxu0 %v676
    %731 = vmatpush.xpose.msra.mxu0 %v673
    %732 = vmatpush.xpose.msra.mxu0 %v670
    %733 = vmatpush.xpose.msra.mxu0 %v667
    %734 = vmatpush.xpose.msra.mxu0 %v664
    %735 = vmatpush.xpose.msra.mxu0 %v661
    %736 = vmatpush.xpose.msra.mxu0 %v658
    %737 = vmatpush.xpose.msra.mxu0 %v655
    %738 = vmatpush.xpose.msra.mxu0 %v652
    %739 = vmatpush.xpose.msra.mxu0 %v649
    %740 = vmatpush.xpose.msra.mxu0 %v646
    %741 = vmatpush.xpose.msra.mxu0 %v643
    %742 = vmatpush.xpose.msra.mxu0 %v640
    %743 = vmatpush.xpose.msra.mxu0 %v637
    %744 = vmatpush.xpose.msra.mxu0 %v634
    %745 = vmatmul.f32.gmra.mxu0 %v631
    %v746 = vpop.f32.mrf.mxu0
    %v747 = vadd.f32 0.0, %v746
    %748 = vdwg.mxu0
    %749 = vmatpush.xpose.msra.mxu0 %v727
    %750 = vmatpush.xpose.msra.mxu0 %v724
    %751 = vmatpush.xpose.msra.mxu0 %v721
    %752 = vmatpush.xpose.msra.mxu0 %v718
    %753 = vmatpush.xpose.msra.mxu0 %v715
    %754 = vmatpush.xpose.msra.mxu0 %v712
    %755 = vmatpush.xpose.msra.mxu0 %v709
    %756 = vmatpush.xpose.msra.mxu0 %v706
    %757 = vmatpush.xpose.msra.mxu0 %v703
    %758 = vmatpush.xpose.msra.mxu0 %v700
    %759 = vmatpush.xpose.msra.mxu0 %v697
    %760 = vmatpush.xpose.msra.mxu0 %v694
    %761 = vmatpush.xpose.msra.mxu0 %v691
    %762 = vmatpush.xpose.msra.mxu0 %v688
    %763 = vmatpush.xpose.msra.mxu0 %v685
    %764 = vmatpush.xpose.msra.mxu0 %v682
    %765 = vmatmul.f32.gmra.mxu0 %v631
    %v766 = vpop.f32.mrf.mxu0
    %v767 = vadd.f32 0.0, %v766
    %768 = vdwg.mxu0
    %v771 = vrot.slane %v767, 7
    %vm772 = vcmask 1040384
    %v773 = vsel %vm772, %v747, %v771
    %v775 = vlaneseq
    %vm776 = vcmp.ge.s32.totalorder %v775, 0
    %vm777 = vcmp.lt.s32.totalorder %v775, 256
    %vm778 = vmand %vm776, %vm777
    %779 = vst.msk [vmem:[#allocation2] sm:$0x3] %vm778, %v773
    // Predicated region
    $region30: #{tpu_custom_call.1} parent=1 // pred_check
      _
    $region31: #{tpu_custom_call.1} parent=1 // pred_check_branch
      %781 = sbr.rel (0) target = $region33
    $region32: #{tpu_custom_call.1} parent=1 // pred_region
      _
    $region33: #{tpu_custom_call.1} parent=1 // pred_fallthru
      _
    // Predicated region
    $region34: #{tpu_custom_call.1} parent=1 // pred_check
      _
    $region35: #{tpu_custom_call.1} parent=1 // pred_check_branch
      %783 = sbr.rel (0) target = $region37
    $region36: #{tpu_custom_call.1} parent=1 // pred_region
      %785 = vsyncadd [#allocation3], 0
      %s787 = sshll.u32 [#allocation2], 4
      %s788 = int_to_ptr.vmem [resolvable:$true] %s787
      %s789 = sshll.u32 %s8, 4
      %s790 = int_to_ptr.hbm [resolvable:$true] %s789
      %792 = dma.vmem_to_hbm [thread:$0]  %s788, 32, %s790, [#allocation3]
    $region37: #{tpu_custom_call.1} parent=1 // pred_fallthru
      _
    // Predicated region
    $region38: #{tpu_custom_call.1} parent=1 // pred_check
      _
    $region39: #{tpu_custom_call.1} parent=1 // pred_check_branch
      %794 = sbr.rel (0) target = $region41
    $region40: #{tpu_custom_call.1} parent=1 // pred_region
      _
    $region41: #{tpu_custom_call.1} parent=1 // pred_fallthru
      _
    // Predicated region
    $region42: #{tpu_custom_call.1} parent=1 // pred_check
      _
    $region43: #{tpu_custom_call.1} parent=1 // pred_check_branch
      %796 = sbr.rel (0) target = $region45
    $region44: #{tpu_custom_call.1} parent=1 // pred_region
      %798 = dma.done [#allocation3], 32
    $region45: #{tpu_custom_call.1} parent=1 // pred_fallthru
      _
    %799 = vsyncpa [#allocation3], 1

</llo_original>
